<compile_context>
chip_gen: v7x
topology: tpu7x:2x2x1
jax: 0.10.0
libtpu: 0.0.40
codegen_flags: <defaults>
</compile_context>

<pallas_src>
import numpy as np
import jax
import jax.numpy as jnp
from jax import lax
from jax.experimental import pallas as pl
from jax.experimental.pallas import tpu as pltpu

INFINITY = 1000000000000.0


def _multi_tensorcore_chip():
    """Best-effort probe: does this chip have >1 TensorCore (v7x)?"""
    try:
        kind = jax.devices()[0].device_kind.lower()
    except Exception:
        return False
    return ("v7" in kind) or ("tpu7" in kind) or ("7x" in kind)


# -----------------------------------------------------------------------------
# Kernel body (shared by both grid layouts).
# -----------------------------------------------------------------------------
def _make_global_pointer_kernel(heads, head_size, P):
    d = head_size

    def kernel(x_ref, w_ref, b_ref, cs_ref, ma_ref, out_ref):
        nb = x_ref.shape[0]                      # batches in this block (B or 1)
        w = w_ref[...]                           # (H, 2P)  bf16
        bvec = b_ref[...]                        # (1, 2P)  f32
        cs = cs_ref[...]                         # (S, 2P)  f32 cos | signed sin

        for b in range(nb):                      # static unroll
            # fused q/k projection for all heads (base + swap-partner columns),
            # single-pass bf16 MXU matmul with fp32 accumulation
            proj = jnp.dot(x_ref[b], w,
                           preferred_element_type=jnp.float32) + bvec      # (S, 2P)

            # RoPE: one full-width multiply + one add (q pre-scaled by 1/sqrt(d))
            prod = proj * cs                                               # (S, 2P)
            r = prod[:, :P] + prod[:, P:]                                  # (S, P)

            ma = ma_ref[b]                       # (2, S, S) fused mask terms
            M = ma[0]                            # multiplicative mask
            A = ma[1]                            # additive mask (incl. tril sentinel)

            for h in range(heads):               # static unroll
                q = r[:, h * d:(h + 1) * d]                                 # (S, d)
                k = r[:, heads * d + h * d: heads * d + (h + 1) * d]        # (S, d)
                lg = lax.dot_general(q, k, (((1,), (1,)), ((), ())),
                                     preferred_element_type=jnp.float32)   # (S, S)
                out_ref[b, h] = lg * M + A       # single fused mask FMA

    return kernel


# -----------------------------------------------------------------------------
# Wrapper: parameter plumbing (weight permutation / fusion, RoPE tables, fused
# masks) in plain JAX; compute in the kernel.
# -----------------------------------------------------------------------------
def global_pointer_pallas(x, weight, bias, heads, head_size, mask=None,
                          fold_batch=None):
    B, S, H = x.shape
    d = head_size
    assert d % 2 == 0
    m = d // 2
    P = heads * 2 * d                        # fused base-projection width
    inv_s = 1.0 / (float(d) ** 0.5)
    neg = -INFINITY * inv_s                  # pre-scaled mask sentinel

    if fold_batch is None:
        # single-TC chips (v5e/v6e) prefer one fused step; v7x keeps a parallel axis
        fold_batch = not _multi_tensorcore_chip()

    # ---- weights / bias: evens-then-odds permutation + pair-swap partner ----------
    perm = np.concatenate([np.arange(0, d, 2), np.arange(1, d, 2)])
    perm_sw = np.concatenate([perm[m:], perm[:m]])       # rope "rotated-half" partner

    wt = weight.T.reshape(H, heads, 2 * d)               # (H, heads, 2d)
    wq, wk = wt[:, :, :d], wt[:, :, d:]                  # (H, heads, d)

    def wflat(w, p):                                     # -> (H, heads*d), head-major
        return w[:, :, p].reshape(H, heads * d)

    w_base = jnp.concatenate([wflat(wq, perm) * inv_s, wflat(wk, perm)], axis=1)
    w_swap = jnp.concatenate([wflat(wq, perm_sw) * inv_s, wflat(wk, perm_sw)], axis=1)
    w_big = jnp.concatenate([w_base, w_swap], axis=1).astype(jnp.bfloat16)  # (H, 2P)

    br = bias.reshape(heads, 2 * d)
    bq, bk = br[:, :d], br[:, d:]

    def bflat(b_, p):
        return b_[:, p].reshape(heads * d)

    b_base = jnp.concatenate([bflat(bq, perm) * inv_s, bflat(bk, perm)])
    b_swap = jnp.concatenate([bflat(bq, perm_sw) * inv_s, bflat(bk, perm_sw)])
    b_big = jnp.concatenate([b_base, b_swap]).reshape(1, 2 * P).astype(jnp.float32)

    # ---- RoPE tables, laid out to match the projection's column order -------------
    pos = jnp.arange(S, dtype=jnp.float32)
    inv_freq = jnp.power(10000.0, -2.0 * jnp.arange(m, dtype=jnp.float32) / d)
    ang = pos[:, None] * inv_freq[None, :]               # (S, m)
    mod_idx = perm % m
    sign = np.where(perm % 2 == 0, -1.0, 1.0).astype(np.float32)
    cos_d = jnp.cos(ang)[:, mod_idx]                     # (S, d)
    sin_d = jnp.sin(ang)[:, mod_idx] * sign[None, :]     # (S, d), sign folded in
    cos_sin = jnp.concatenate([jnp.tile(cos_d, (1, 2 * heads)),
                               jnp.tile(sin_d, (1, 2 * heads))], axis=1)    # (S, 2P)

    # ---- fused masks: one FMA worth of data per batch ------------------------------
    if mask is None:
        mask = jnp.ones((B, S), dtype=jnp.float32)
    mask_f = mask.astype(jnp.float32)
    m_row = mask_f[:, :, None]                           # (B, S, 1)
    m_col = mask_f[:, None, :]                           # (B, 1, S)
    tril_add = jnp.asarray(
        (-np.tril(np.ones((S, S), dtype=np.float32), k=-1)
         * np.float32(INFINITY * inv_s)).astype(np.float32))                # (S, S)
    Mm = m_row * m_col                                                       # (B, S, S)
    Aa = neg * (1.0 - m_row) * m_col + neg * (1.0 - m_col) + tril_add[None]  # (B, S, S)
    mask_ma = jnp.stack([Mm, Aa], axis=1).astype(jnp.float32)                # (B,2,S,S)

    x_bf16 = x.astype(jnp.bfloat16)                      # bf16 MXU operand, half DMA

    kernel = _make_global_pointer_kernel(heads, d, P)

    flops = (2 * B * S * H * (2 * P)                     # projection
             + 2 * B * heads * S * S * d                 # logits
             + B * (3 * S * 2 * P + 2 * heads * S * S))  # RoPE + mask FMA
    bytes_accessed = (2 * x_bf16.size + 2 * w_big.size + 4 * b_big.size
                      + 4 * cos_sin.size + 4 * mask_ma.size
                      + 4 * B * heads * S * S)

    if fold_batch:
        grid = (1,)
        in_specs = [
            pl.BlockSpec((B, S, H), lambda i: (0, 0, 0)),        # x (all batches)
            pl.BlockSpec((H, 2 * P), lambda i: (0, 0)),          # fused weights (bf16)
            pl.BlockSpec((1, 2 * P), lambda i: (0, 0)),          # fused bias
            pl.BlockSpec((S, 2 * P), lambda i: (0, 0)),          # cos | signed sin
            pl.BlockSpec((B, 2, S, S), lambda i: (0, 0, 0, 0)),  # fused masks
        ]
        out_specs = pl.BlockSpec((B, heads, S, S), lambda i: (0, 0, 0, 0))
        dims = ("arbitrary",)
    else:
        grid = (B,)
        in_specs = [
            pl.BlockSpec((1, S, H), lambda b: (b, 0, 0)),
            pl.BlockSpec((H, 2 * P), lambda b: (0, 0)),
            pl.BlockSpec((1, 2 * P), lambda b: (0, 0)),
            pl.BlockSpec((S, 2 * P), lambda b: (0, 0)),
            pl.BlockSpec((1, 2, S, S), lambda b: (b, 0, 0, 0)),
        ]
        out_specs = pl.BlockSpec((1, heads, S, S), lambda b: (b, 0, 0, 0))
        dims = ("parallel",)

    return pl.pallas_call(
        kernel,
        out_shape=jax.ShapeDtypeStruct((B, heads, S, S), jnp.float32),
        grid_spec=pltpu.PrefetchScalarGridSpec(
            num_scalar_prefetch=0,
            grid=grid,
            in_specs=in_specs,
            out_specs=out_specs),
        compiler_params=pltpu.CompilerParams(dimension_semantics=dims),
        cost_estimate=pl.CostEstimate(
            flops=flops, transcendentals=0, bytes_accessed=bytes_accessed),
    )(x_bf16, w_big, b_big, cos_sin, mask_ma)


# -----------------------------------------------------------------------------
# Pure-JAX reference replicating the PyTorch module line by line (for checking).
# -----------------------------------------------------------------------------
def global_pointer_ref(x, weight, bias, heads, head_size, mask=None):
    B, S, H = x.shape
    d = head_size
    proj = jnp.dot(x, weight.T, precision=lax.Precision.HIGHEST) + bias
    proj = proj.reshape(B, S, heads, 2 * d)
    qw, kw = proj[..., :d], proj[..., d:]

    # SinusoidalPositionEmbedding(d, 'zero')
    pos_ids = jnp.arange(S, dtype=jnp.float32)[None]
    inv_freq = jnp.power(10000.0, -2.0 * jnp.arange(d // 2, dtype=jnp.float32) / d)
    emb = jnp.einsum('bn,d->bnd', pos_ids, inv_freq)
    emb = jnp.stack([jnp.sin(emb), jnp.cos(emb)], axis=-1).reshape(1, S, d)

    # apply_rotary_position_embeddings (ndim == 4 branch, torch .repeat == tile)
    cos_pos = jnp.tile(emb[..., None, 1::2], (1, 1, 1, 2))
    sin_pos = jnp.tile(emb[..., None, ::2], (1, 1, 1, 2))
    qw2 = jnp.stack([-qw[..., 1::2], qw[..., ::2]], axis=-1).reshape(qw.shape)
    qwr = qw * cos_pos + qw2 * sin_pos
    kw2 = jnp.stack([-kw[..., 1::2], kw[..., ::2]], axis=-1).reshape(kw.shape)
    kwr = kw * cos_pos + kw2 * sin_pos

    logits = jnp.einsum('bmhd,bnhd->bhmn', qwr, kwr,
                        precision=lax.Precision.HIGHEST)

    def seq_mask(xv, mk, value, dim):
        if mk is None:
            return xv
        mm = mk
        for _ in range(dim - 1):
            mm = jnp.expand_dims(mm, 1)
        while mm.ndim < xv.ndim:
            mm = jnp.expand_dims(mm, mm.ndim)
        return xv * mm + value * (1 - mm)

    logits = seq_mask(logits, mask, -INFINITY, 2)
    logits = seq_mask(logits, mask, -INFINITY, 3)
    tril = jnp.tril(jnp.ones_like(logits), k=-1)
    logits = logits - tril * INFINITY
    return logits / d ** 0.5


if __name__ == "__main__":
    B, S, H = 2, 8, 32
    heads, head_size = 2, 8

    key = jax.random.PRNGKey(0)
    kx, kw, kb = jax.random.split(key, 3)
    x = jax.random.normal(kx, (B, S, H), dtype=jnp.float32)
    # nn.Linear(hidden_size, heads * head_size * 2): weight (out, in), bias (out,)
    weight = jax.random.normal(kw, (heads * head_size * 2, H), dtype=jnp.float32) * 0.05
    bias = jax.random.normal(kb, (heads * head_size * 2,), dtype=jnp.float32) * 0.05
    # padding mask: batch 0 fully valid, batch 1 has 2 padded positions
    mask = jnp.array([[1, 1, 1, 1, 1, 1, 1, 1],
                      [1, 1, 1, 1, 1, 1, 0, 0]], dtype=jnp.float32)

    ref = global_pointer_ref(x, weight, bias, heads, head_size, mask=mask)

    # exercise both grid layouts of the per-generation config switch
    for fold in (True, False):
        out = global_pointer_pallas(x, weight, bias, heads, head_size,
                                    mask=mask, fold_batch=fold)
        out = jax.block_until_ready(out)
        np.testing.assert_allclose(np.asarray(out), np.asarray(ref),
                                   rtol=1e-3, atol=1e-3)

    print("KERNEL_OK")
</pallas_src>

<mosaic_0001>
module attributes {stable_mosaic.version = 11 : i64} {
  func.func @kernel(%arg0: i32, %arg1: memref<2x8x32xbf16, #tpu.memory_space<vmem>>, %arg2: memref<32x64xbf16, #tpu.memory_space<vmem>>, %arg3: memref<1x64xf32, #tpu.memory_space<vmem>>, %arg4: memref<8x64xf32, #tpu.memory_space<vmem>>, %arg5: memref<2x2x8x8xf32, #tpu.memory_space<vmem>>, %arg6: memref<2x2x8x8xf32, #tpu.memory_space<vmem>>) attributes {dimension_semantics = [#tpu.dimension_semantics<arbitrary>], iteration_bounds = array<i64: 1>, scalar_prefetch = 0 : i64, scratch_operands = 0 : i64, tpu.core_type = #tpu.core_type<tc>, window_params = [{pipeline_mode = #tpu.pipeline_mode<synchronous>, transform_indices = @transform_0, window_bounds = array<i64: 2, 8, 32>}, {pipeline_mode = #tpu.pipeline_mode<synchronous>, transform_indices = @transform_1, window_bounds = array<i64: 32, 64>}, {pipeline_mode = #tpu.pipeline_mode<synchronous>, transform_indices = @transform_2, window_bounds = array<i64: 1, 64>}, {pipeline_mode = #tpu.pipeline_mode<synchronous>, transform_indices = @transform_3, window_bounds = array<i64: 8, 64>}, {pipeline_mode = #tpu.pipeline_mode<synchronous>, transform_indices = @transform_4, window_bounds = array<i64: 2, 2, 8, 8>}, {pipeline_mode = #tpu.pipeline_mode<synchronous>, transform_indices = @transform_5, window_bounds = array<i64: 2, 2, 8, 8>}]} {
    %c0 = arith.constant 0 : index
    %c0_0 = arith.constant 0 : index
    %0 = vector.load %arg2[%c0, %c0_0] : memref<32x64xbf16, #tpu.memory_space<vmem>>, vector<32x64xbf16>
    %c0_1 = arith.constant 0 : index
    %c0_2 = arith.constant 0 : index
    %1 = vector.load %arg3[%c0_1, %c0_2] : memref<1x64xf32, #tpu.memory_space<vmem>>, vector<1x64xf32>
    %c0_3 = arith.constant 0 : index
    %c0_4 = arith.constant 0 : index
    %2 = vector.load %arg4[%c0_3, %c0_4] : memref<8x64xf32, #tpu.memory_space<vmem>>, vector<8x64xf32>
    %c0_5 = arith.constant 0 : index
    %c0_6 = arith.constant 0 : index
    %c0_7 = arith.constant 0 : index
    %3 = vector.load %arg1[%c0_5, %c0_6, %c0_7] : memref<2x8x32xbf16, #tpu.memory_space<vmem>>, vector<1x8x32xbf16>
    %4 = vector.shape_cast %3 : vector<1x8x32xbf16> to vector<8x32xbf16>
    %cst = arith.constant dense<0.000000e+00> : vector<8x64xf32>
    %5 = tpu.matmul %4, %0, %cst {dimension_numbers = #tpu.dot_dimension_numbers<[1], [0], [0], [1], [0, 0, 1, 1], [], []>} : vector<8x32xbf16>, vector<32x64xbf16>, vector<8x64xf32> -> vector<8x64xf32>
    %6 = vector.broadcast %1 : vector<1x64xf32> to vector<8x64xf32>
    %7 = arith.addf %5, %6 : vector<8x64xf32>
    %8 = arith.mulf %7, %2 : vector<8x64xf32>
    %9 = vector.extract_strided_slice %8 {offsets = [0, 0], sizes = [8, 32], strides = [1, 1]} : vector<8x64xf32> to vector<8x32xf32>
    %10 = vector.extract_strided_slice %8 {offsets = [0, 32], sizes = [8, 32], strides = [1, 1]} : vector<8x64xf32> to vector<8x32xf32>
    %11 = arith.addf %9, %10 : vector<8x32xf32>
    %c0_8 = arith.constant 0 : index
    %c0_9 = arith.constant 0 : index
    %c0_10 = arith.constant 0 : index
    %c0_11 = arith.constant 0 : index
    %12 = vector.load %arg5[%c0_8, %c0_9, %c0_10, %c0_11] : memref<2x2x8x8xf32, #tpu.memory_space<vmem>>, vector<1x2x8x8xf32>
    %13 = vector.shape_cast %12 : vector<1x2x8x8xf32> to vector<2x8x8xf32>
    %14 = vector.extract_strided_slice %13 {offsets = [0, 0, 0], sizes = [1, 8, 8], strides = [1, 1, 1]} : vector<2x8x8xf32> to vector<1x8x8xf32>
    %15 = vector.shape_cast %14 : vector<1x8x8xf32> to vector<8x8xf32>
    %16 = vector.extract_strided_slice %13 {offsets = [1, 0, 0], sizes = [1, 8, 8], strides = [1, 1, 1]} : vector<2x8x8xf32> to vector<1x8x8xf32>
    %17 = vector.shape_cast %16 : vector<1x8x8xf32> to vector<8x8xf32>
    %18 = vector.extract_strided_slice %11 {offsets = [0, 0], sizes = [8, 8], strides = [1, 1]} : vector<8x32xf32> to vector<8x8xf32>
    %19 = vector.extract_strided_slice %11 {offsets = [0, 16], sizes = [8, 8], strides = [1, 1]} : vector<8x32xf32> to vector<8x8xf32>
    %cst_12 = arith.constant dense<0.000000e+00> : vector<8x8xf32>
    %20 = tpu.matmul %18, %19, %cst_12 {dimension_numbers = #tpu.dot_dimension_numbers<[1], [1], [0], [0], [0, 0, 1, 0], [], []>} : vector<8x8xf32>, vector<8x8xf32>, vector<8x8xf32> -> vector<8x8xf32>
    %21 = arith.mulf %20, %15 : vector<8x8xf32>
    %22 = arith.addf %21, %17 : vector<8x8xf32>
    %c0_13 = arith.constant 0 : index
    %c0_14 = arith.constant 0 : index
    %c0_15 = arith.constant 0 : index
    %c0_16 = arith.constant 0 : index
    %23 = vector.load %arg6[%c0_13, %c0_14, %c0_15, %c0_16] : memref<2x2x8x8xf32, #tpu.memory_space<vmem>>, vector<1x1x8x8xf32>
    %24 = vector.shape_cast %23 : vector<1x1x8x8xf32> to vector<8x8xf32>
    %25 = vector.shape_cast %22 : vector<8x8xf32> to vector<1x1x8x8xf32>
    tpu.vector_store %arg6[%c0_13, %c0_14, %c0_15, %c0_16], %25 {strides = array<i32>} : memref<2x2x8x8xf32, #tpu.memory_space<vmem>>, vector<1x1x8x8xf32>,
    %26 = vector.extract_strided_slice %11 {offsets = [0, 8], sizes = [8, 8], strides = [1, 1]} : vector<8x32xf32> to vector<8x8xf32>
    %27 = vector.extract_strided_slice %11 {offsets = [0, 24], sizes = [8, 8], strides = [1, 1]} : vector<8x32xf32> to vector<8x8xf32>
    %cst_17 = arith.constant dense<0.000000e+00> : vector<8x8xf32>
    %28 = tpu.matmul %26, %27, %cst_17 {dimension_numbers = #tpu.dot_dimension_numbers<[1], [1], [0], [0], [0, 0, 1, 0], [], []>} : vector<8x8xf32>, vector<8x8xf32>, vector<8x8xf32> -> vector<8x8xf32>
    %29 = arith.mulf %28, %15 : vector<8x8xf32>
    %30 = arith.addf %29, %17 : vector<8x8xf32>
    %c0_18 = arith.constant 0 : index
    %c1 = arith.constant 1 : index
    %c0_19 = arith.constant 0 : index
    %c0_20 = arith.constant 0 : index
    %31 = vector.load %arg6[%c0_18, %c1, %c0_19, %c0_20] : memref<2x2x8x8xf32, #tpu.memory_space<vmem>>, vector<1x1x8x8xf32>
    %32 = vector.shape_cast %31 : vector<1x1x8x8xf32> to vector<8x8xf32>
    %33 = vector.shape_cast %30 : vector<8x8xf32> to vector<1x1x8x8xf32>
    tpu.vector_store %arg6[%c0_18, %c1, %c0_19, %c0_20], %33 {strides = array<i32>} : memref<2x2x8x8xf32, #tpu.memory_space<vmem>>, vector<1x1x8x8xf32>,
    %c1_21 = arith.constant 1 : index
    %c0_22 = arith.constant 0 : index
    %c0_23 = arith.constant 0 : index
    %34 = vector.load %arg1[%c1_21, %c0_22, %c0_23] : memref<2x8x32xbf16, #tpu.memory_space<vmem>>, vector<1x8x32xbf16>
    %35 = vector.shape_cast %34 : vector<1x8x32xbf16> to vector<8x32xbf16>
    %cst_24 = arith.constant dense<0.000000e+00> : vector<8x64xf32>
    %36 = tpu.matmul %35, %0, %cst_24 {dimension_numbers = #tpu.dot_dimension_numbers<[1], [0], [0], [1], [0, 0, 1, 1], [], []>} : vector<8x32xbf16>, vector<32x64xbf16>, vector<8x64xf32> -> vector<8x64xf32>
    %37 = vector.broadcast %1 : vector<1x64xf32> to vector<8x64xf32>
    %38 = arith.addf %36, %37 : vector<8x64xf32>
    %39 = arith.mulf %38, %2 : vector<8x64xf32>
    %40 = vector.extract_strided_slice %39 {offsets = [0, 0], sizes = [8, 32], strides = [1, 1]} : vector<8x64xf32> to vector<8x32xf32>
    %41 = vector.extract_strided_slice %39 {offsets = [0, 32], sizes = [8, 32], strides = [1, 1]} : vector<8x64xf32> to vector<8x32xf32>
    %42 = arith.addf %40, %41 : vector<8x32xf32>
    %c1_25 = arith.constant 1 : index
    %c0_26 = arith.constant 0 : index
    %c0_27 = arith.constant 0 : index
    %c0_28 = arith.constant 0 : index
    %43 = vector.load %arg5[%c1_25, %c0_26, %c0_27, %c0_28] : memref<2x2x8x8xf32, #tpu.memory_space<vmem>>, vector<1x2x8x8xf32>
    %44 = vector.shape_cast %43 : vector<1x2x8x8xf32> to vector<2x8x8xf32>
    %45 = vector.extract_strided_slice %44 {offsets = [0, 0, 0], sizes = [1, 8, 8], strides = [1, 1, 1]} : vector<2x8x8xf32> to vector<1x8x8xf32>
    %46 = vector.shape_cast %45 : vector<1x8x8xf32> to vector<8x8xf32>
    %47 = vector.extract_strided_slice %44 {offsets = [1, 0, 0], sizes = [1, 8, 8], strides = [1, 1, 1]} : vector<2x8x8xf32> to vector<1x8x8xf32>
    %48 = vector.shape_cast %47 : vector<1x8x8xf32> to vector<8x8xf32>
    %49 = vector.extract_strided_slice %42 {offsets = [0, 0], sizes = [8, 8], strides = [1, 1]} : vector<8x32xf32> to vector<8x8xf32>
    %50 = vector.extract_strided_slice %42 {offsets = [0, 16], sizes = [8, 8], strides = [1, 1]} : vector<8x32xf32> to vector<8x8xf32>
    %cst_29 = arith.constant dense<0.000000e+00> : vector<8x8xf32>
    %51 = tpu.matmul %49, %50, %cst_29 {dimension_numbers = #tpu.dot_dimension_numbers<[1], [1], [0], [0], [0, 0, 1, 0], [], []>} : vector<8x8xf32>, vector<8x8xf32>, vector<8x8xf32> -> vector<8x8xf32>
    %52 = arith.mulf %51, %46 : vector<8x8xf32>
    %53 = arith.addf %52, %48 : vector<8x8xf32>
    %c1_30 = arith.constant 1 : index
    %c0_31 = arith.constant 0 : index
    %c0_32 = arith.constant 0 : index
    %c0_33 = arith.constant 0 : index
    %54 = vector.load %arg6[%c1_30, %c0_31, %c0_32, %c0_33] : memref<2x2x8x8xf32, #tpu.memory_space<vmem>>, vector<1x1x8x8xf32>
    %55 = vector.shape_cast %54 : vector<1x1x8x8xf32> to vector<8x8xf32>
    %56 = vector.shape_cast %53 : vector<8x8xf32> to vector<1x1x8x8xf32>
    tpu.vector_store %arg6[%c1_30, %c0_31, %c0_32, %c0_33], %56 {strides = array<i32>} : memref<2x2x8x8xf32, #tpu.memory_space<vmem>>, vector<1x1x8x8xf32>,
    %57 = vector.extract_strided_slice %42 {offsets = [0, 8], sizes = [8, 8], strides = [1, 1]} : vector<8x32xf32> to vector<8x8xf32>
    %58 = vector.extract_strided_slice %42 {offsets = [0, 24], sizes = [8, 8], strides = [1, 1]} : vector<8x32xf32> to vector<8x8xf32>
    %cst_34 = arith.constant dense<0.000000e+00> : vector<8x8xf32>
    %59 = tpu.matmul %57, %58, %cst_34 {dimension_numbers = #tpu.dot_dimension_numbers<[1], [1], [0], [0], [0, 0, 1, 0], [], []>} : vector<8x8xf32>, vector<8x8xf32>, vector<8x8xf32> -> vector<8x8xf32>
    %60 = arith.mulf %59, %46 : vector<8x8xf32>
    %61 = arith.addf %60, %48 : vector<8x8xf32>
    %c1_35 = arith.constant 1 : index
    %c1_36 = arith.constant 1 : index
    %c0_37 = arith.constant 0 : index
    %c0_38 = arith.constant 0 : index
    %62 = vector.load %arg6[%c1_35, %c1_36, %c0_37, %c0_38] : memref<2x2x8x8xf32, #tpu.memory_space<vmem>>, vector<1x1x8x8xf32>
    %63 = vector.shape_cast %62 : vector<1x1x8x8xf32> to vector<8x8xf32>
    %64 = vector.shape_cast %61 : vector<8x8xf32> to vector<1x1x8x8xf32>
    tpu.vector_store %arg6[%c1_35, %c1_36, %c0_37, %c0_38], %64 {strides = array<i32>} : memref<2x2x8x8xf32, #tpu.memory_space<vmem>>, vector<1x1x8x8xf32>,
    return
  }
  func.func @transform_0(%arg0: i32) -> (i32, i32, i32) {
    %c0_i32 = arith.constant 0 : i32
    %c0_i32_0 = arith.constant 0 : i32
    %c0_i32_1 = arith.constant 0 : i32
    %c0_i32_2 = arith.constant 0 : i32
    return %c0_i32, %c0_i32_0, %c0_i32_1 : i32, i32, i32
  }
  func.func @transform_1(%arg0: i32) -> (i32, i32) {
    %c0_i32 = arith.constant 0 : i32
    %c0_i32_0 = arith.constant 0 : i32
    %c0_i32_1 = arith.constant 0 : i32
    return %c0_i32, %c0_i32_0 : i32, i32
  }
  func.func @transform_2(%arg0: i32) -> (i32, i32) {
    %c0_i32 = arith.constant 0 : i32
    %c0_i32_0 = arith.constant 0 : i32
    %c0_i32_1 = arith.constant 0 : i32
    return %c0_i32, %c0_i32_0 : i32, i32
  }
  func.func @transform_3(%arg0: i32) -> (i32, i32) {
    %c0_i32 = arith.constant 0 : i32
    %c0_i32_0 = arith.constant 0 : i32
    %c0_i32_1 = arith.constant 0 : i32
    return %c0_i32, %c0_i32_0 : i32, i32
  }
  func.func @transform_4(%arg0: i32) -> (i32, i32, i32, i32) {
    %c0_i32 = arith.constant 0 : i32
    %c0_i32_0 = arith.constant 0 : i32
    %c0_i32_1 = arith.constant 0 : i32
    %c0_i32_2 = arith.constant 0 : i32
    %c0_i32_3 = arith.constant 0 : i32
    return %c0_i32, %c0_i32_0, %c0_i32_1, %c0_i32_2 : i32, i32, i32, i32
  }
  func.func @transform_5(%arg0: i32) -> (i32, i32, i32, i32) {
    %c0_i32 = arith.constant 0 : i32
    %c0_i32_0 = arith.constant 0 : i32
    %c0_i32_1 = arith.constant 0 : i32
    %c0_i32_2 = arith.constant 0 : i32
    %c0_i32_3 = arith.constant 0 : i32
    return %c0_i32, %c0_i32_0, %c0_i32_1, %c0_i32_2 : i32, i32, i32, i32
  }
}

</mosaic_0001>

<llo_original>
// kernel: tpu_custom_call.1
$region0: #{tpu_custom_call.1}
  #allocation0 [shape = 'u32[]', space=smem, size = 0x4, offset = 0x4, fixed_abs, tag = 'smem constant byte address 0x4 - core index']
  #allocation1 [shape = 'u32[144,128]{1,0:T(1,128)}', space=vmem, size = 0x12000, scoped, tag = 'internal scratch']
  %s0 = inlined_call_operand.hbm [shape: bf16[2,8,32], index: 0, kind: input, shape index: {}]
  %s1 = inlined_call_operand.hbm [shape: bf16[32,64], index: 1, kind: input, shape index: {}]
  %s2 = inlined_call_operand.vmem [shape: f32[1,64], index: 2, kind: input, shape index: {}]
  %s3 = inlined_call_operand.vmem [shape: f32[8,64], index: 3, kind: input, shape index: {}]
  %s4 = inlined_call_operand.hbm [shape: f32[2,2,8,8], index: 4, kind: input, shape index: {}]
  %s5 = inlined_call_operand.hbm [shape: f32[2,2,8,8], index: 5, kind: output, shape index: {}]
  %s6 = sld [smem:[#allocation0]]
  $region42: #{tpu_custom_call.1} parent=0
    _
  %s8 = ssub.s32 1, %s6
  %s9 = scalar_select 0, %s8, %s6
  $region1: #{tpu_custom_call.1} parent=0
    #allocation2 [shape = 'u8[4096]{0}', space=vmem, size = 0x1000, scoped, tag = 'input window, operand 0, single buffered']
    #allocation3 [shape = 's32[1]{0}', space=sflag, size = 0x4, scoped, tag = 'scoped memory for tpu_custom_call.1']
    #allocation4 [shape = 's32[1]{0}', space=sflag, size = 0x4, scoped, tag = 'scoped memory for tpu_custom_call.1']
    #allocation5 [shape = 'u8[8192]{0}', space=vmem, size = 0x2000, scoped, tag = 'input window, operand 1, single buffered']
    #allocation6 [shape = 's32[1]{0}', space=sflag, size = 0x4, scoped, tag = 'scoped memory for tpu_custom_call.1']
    #allocation7 [shape = 'u8[16384]{0}', space=vmem, size = 0x4000, scoped, tag = 'input window, operand 4, single buffered']
    #allocation8 [shape = 'u8[16384]{0}', space=vmem, size = 0x4000, scoped, tag = 'output window, operand 0, single buffered']
    %10 = vsyncpa [#allocation3], 0
    %11 = vsyncpa [#allocation6], 0
    %12 = vsyncpa [#allocation4], 0
    // Predicated region
    $region2: #{tpu_custom_call.1} parent=1 // pred_check
      _
    $region3: #{tpu_custom_call.1} parent=1 // pred_check_branch
      %14 = sbr.rel (0) target = $region5
    $region4: #{tpu_custom_call.1} parent=1 // pred_region
      %s16 = ssub.s32 128, 128
      %17 = vsyncadd [#allocation3], %s16
      %s18 = sshll.u32 [#allocation2], 4
      %s19 = int_to_ptr.vmem [resolvable:$true] %s18
      %24 = dma.hbm_to_vmem [thread:$0]  %s0, 128, %s19, [#allocation3], 64, 64, 4
    $region5: #{tpu_custom_call.1} parent=1 // pred_fallthru
      _
    // Predicated region
    $region6: #{tpu_custom_call.1} parent=1 // pred_check
      _
    $region7: #{tpu_custom_call.1} parent=1 // pred_check_branch
      %26 = sbr.rel (0) target = $region9
    $region8: #{tpu_custom_call.1} parent=1 // pred_region
      %s28 = ssub.s32 256, 256
      %29 = vsyncadd [#allocation6], %s28
      %s30 = sshll.u32 [#allocation5], 4
      %s31 = int_to_ptr.vmem [resolvable:$true] %s30
      %36 = dma.hbm_to_vmem [thread:$0]  %s1, 256, %s31, [#allocation6], 64, 64, 4
    $region9: #{tpu_custom_call.1} parent=1 // pred_fallthru
      _
    // Predicated region
    $region10: #{tpu_custom_call.1} parent=1 // pred_check
      _
    $region11: #{tpu_custom_call.1} parent=1 // pred_check_branch
      %38 = sbr.rel (0) target = $region13
    $region12: #{tpu_custom_call.1} parent=1 // pred_region
      _
    $region13: #{tpu_custom_call.1} parent=1 // pred_fallthru
      _
    // Predicated region
    $region14: #{tpu_custom_call.1} parent=1 // pred_check
      _
    $region15: #{tpu_custom_call.1} parent=1 // pred_check_branch
      %40 = sbr.rel (0) target = $region17
    $region16: #{tpu_custom_call.1} parent=1 // pred_region
      _
    $region17: #{tpu_custom_call.1} parent=1 // pred_fallthru
      _
    // Predicated region
    $region18: #{tpu_custom_call.1} parent=1 // pred_check
      _
    $region19: #{tpu_custom_call.1} parent=1 // pred_check_branch
      %42 = sbr.rel (0) target = $region21
    $region20: #{tpu_custom_call.1} parent=1 // pred_region
      %s44 = ssub.s32 512, 512
      %45 = vsyncadd [#allocation6], %s44
      %s46 = sshll.u32 [#allocation7], 4
      %s47 = int_to_ptr.vmem [resolvable:$true] %s46
      %52 = dma.hbm_to_vmem [thread:$0]  %s4, 512, %s47, [#allocation6], 128, 128, 8
    $region21: #{tpu_custom_call.1} parent=1 // pred_fallthru
      _
    // Predicated region
    $region22: #{tpu_custom_call.1} parent=1 // pred_check
      _
    $region23: #{tpu_custom_call.1} parent=1 // pred_check_branch
      %54 = sbr.rel (0) target = $region25
    $region24: #{tpu_custom_call.1} parent=1 // pred_region
      %55 = dma.done [#allocation3], 128
    $region25: #{tpu_custom_call.1} parent=1 // pred_fallthru
      _
    // Predicated region
    $region26: #{tpu_custom_call.1} parent=1 // pred_check
      _
    $region27: #{tpu_custom_call.1} parent=1 // pred_check_branch
      %57 = sbr.rel (0) target = $region29
    $region28: #{tpu_custom_call.1} parent=1 // pred_region
      %58 = dma.done [#allocation6], 256
    $region29: #{tpu_custom_call.1} parent=1 // pred_fallthru
      _
    // Predicated region
    $region30: #{tpu_custom_call.1} parent=1 // pred_check
      _
    $region31: #{tpu_custom_call.1} parent=1 // pred_check_branch
      %60 = sbr.rel (0) target = $region33
    $region32: #{tpu_custom_call.1} parent=1 // pred_region
      %61 = dma.done [#allocation6], 512
    $region33: #{tpu_custom_call.1} parent=1 // pred_fallthru
      _
    %v63 = vld [vmem:[#allocation5] sm:$0xf]
    %v64 = vld [vmem:[#allocation5 + $0x4] sm:$0xf]
    %v65 = vld [vmem:[#allocation5 + $0x8] sm:$0xf]
    %v66 = vld [vmem:[#allocation5 + $0xc] sm:$0xf]
    %v67 = vld [vmem:[%s2] sm:$0x1]
    %v68 = vld [vmem:[%s3] sm:$0xff]
    %v69 = vld [vmem:[#allocation2] sm:$0xf]
    %v71 = vlaneseq
    %v72 = vshrl.u32 %v71, 7
    %v73 = vsub.s32 0, %v72
    %v74 = vrot.slane %v67, %v73
    %v80 = vunpack.c.l.b16 %v63
    %v81 = vunpack.c.l.b16 %v64
    %v82 = vunpack.c.l.b16 %v65
    %v83 = vunpack.c.l.b16 %v66
    %v84 = vpack.c.b16 %v81, %v80
    %v85 = vpack.c.b16 %v83, %v82
    %vm88 = vcmask 261120
    %v90 = vsel %vm88, %v69, 0
    %92 = vmatprep.subr.bf16.mxu0 0
    %93 = vmatpush1.bf16.msra.mxu0 %v84
    %94 = vmatprep.subr.bf16.mxu0 0
    %95 = vmatpush1.bf16.msra.mxu0 %v85
    %96 = vmatprep.subr.bf16.mxu0 0
    %97 = vmatpush1.bf16.msra.mxu0 0
    %98 = vmatprep.subr.bf16.mxu0 0
    %99 = vmatpush1.bf16.msra.mxu0 0
    %100 = vmatprep.subr.bf16.mxu0 0
    %101 = vmatpush1.bf16.msra.mxu0 0
    %102 = vmatprep.subr.bf16.mxu0 0
    %103 = vmatpush1.bf16.msra.mxu0 0
    %104 = vmatprep.subr.bf16.mxu0 0
    %105 = vmatpush1.bf16.msra.mxu0 0
    %106 = vmatprep.subr.bf16.mxu0 0
    %107 = vmatpush1.bf16.msra.mxu0 0
    %108 = vmatprep.subr.bf16.mxu0 0
    %109 = vmatpush1.bf16.msra.mxu0 0
    %110 = vmatprep.subr.bf16.mxu0 0
    %111 = vmatpush1.bf16.msra.mxu0 0
    %112 = vmatprep.subr.bf16.mxu0 0
    %113 = vmatpush1.bf16.msra.mxu0 0
    %114 = vmatprep.subr.bf16.mxu0 0
    %115 = vmatpush1.bf16.msra.mxu0 0
    %116 = vmatprep.subr.bf16.mxu0 0
    %117 = vmatpush1.bf16.msra.mxu0 0
    %118 = vmatprep.subr.bf16.mxu0 0
    %119 = vmatpush1.bf16.msra.mxu0 0
    %120 = vmatprep.subr.bf16.mxu0 0
    %121 = vmatpush1.bf16.msra.mxu0 0
    %122 = vmatprep.subr.bf16.mxu0 0
    %123 = vmatpush1.bf16.msra.mxu0 0
    %124 = vmatprep.mubr.bf16.mxu0 0
    %125 = vmatmul.mubr.bf16.gmra.mrb[0].mxu0 %v90
    %v126 = vpop.f32.mrb[0].mxu0
    %v127 = vadd.f32 %v74, %v126
    %v128 = vpop.f32.mrb[0].mxu0
    %v129 = vpop.f32.mrb[0].mxu0
    %v130 = vpop.f32.mrb[0].mxu0
    %131 = vdwg.mxu0
    %v132 = vmul.f32 %v127, %v68
    %134 = vrot.lane.b32.xlu0 %v132, 96
    %v135 = vpop.permute.xlu0 %134
    %v137 = vadd.f32 %v132, %v135
    %v138 = vld [vmem:[#allocation7] sm:$0xff]
    %v139 = vld [vmem:[#allocation7 + $0x8] sm:$0xff]
    %141 = vrot.lane.b32.xlu0 %v137, 112
    %v142 = vpop.permute.xlu0 %141
    %vm143 = vcmask 64512
    %v144 = vsel %vm143, %v137, 0
    %v146 = vsel %vm143, %v142, 0
    %148 = vmatprep.subr.mxu0 0.0
    %149 = vmatpush1.xpose.msra.mxu0 %v146
    %150 = vmatprep.subr.mxu0 0.0
    %151 = vmatpush1.xpose.msra.mxu0 0.0
    %152 = vmatprep.subr.mxu0 0.0
    %153 = vmatpush1.xpose.msra.mxu0 0.0
    %154 = vmatprep.subr.mxu0 0.0
    %155 = vmatpush1.xpose.msra.mxu0 0.0
    %156 = vmatprep.subr.mxu0 0.0
    %157 = vmatpush1.xpose.msra.mxu0 0.0
    %158 = vmatprep.subr.mxu0 0.0
    %159 = vmatpush1.xpose.msra.mxu0 0.0
    %160 = vmatprep.subr.mxu0 0.0
    %161 = vmatpush1.xpose.msra.mxu0 0.0
    %162 = vmatprep.subr.mxu0 0.0
    %163 = vmatpush1.xpose.msra.mxu0 0.0
    %164 = vmatprep.subr.mxu0 0.0
    %165 = vmatpush1.xpose.msra.mxu0 0.0
    %166 = vmatprep.subr.mxu0 0.0
    %167 = vmatpush1.xpose.msra.mxu0 0.0
    %168 = vmatprep.subr.mxu0 0.0
    %169 = vmatpush1.xpose.msra.mxu0 0.0
    %170 = vmatprep.subr.mxu0 0.0
    %171 = vmatpush1.xpose.msra.mxu0 0.0
    %172 = vmatprep.subr.mxu0 0.0
    %173 = vmatpush1.xpose.msra.mxu0 0.0
    %174 = vmatprep.subr.mxu0 0.0
    %175 = vmatpush1.xpose.msra.mxu0 0.0
    %176 = vmatprep.subr.mxu0 0.0
    %177 = vmatpush1.xpose.msra.mxu0 0.0
    %178 = vmatprep.subr.mxu0 0.0
    %179 = vmatpush1.xpose.msra.mxu0 0.0
    %180 = vmatprep.subr.mxu0 0.0
    %181 = vmatpush1.xpose.msra.mxu0 0.0
    %182 = vmatprep.subr.mxu0 0.0
    %183 = vmatpush1.xpose.msra.mxu0 0.0
    %184 = vmatprep.subr.mxu0 0.0
    %185 = vmatpush1.xpose.msra.mxu0 0.0
    %186 = vmatprep.subr.mxu0 0.0
    %187 = vmatpush1.xpose.msra.mxu0 0.0
    %188 = vmatprep.subr.mxu0 0.0
    %189 = vmatpush1.xpose.msra.mxu0 0.0
    %190 = vmatprep.subr.mxu0 0.0
    %191 = vmatpush1.xpose.msra.mxu0 0.0
    %192 = vmatprep.subr.mxu0 0.0
    %193 = vmatpush1.xpose.msra.mxu0 0.0
    %194 = vmatprep.subr.mxu0 0.0
    %195 = vmatpush1.xpose.msra.mxu0 0.0
    %196 = vmatprep.subr.mxu0 0.0
    %197 = vmatpush1.xpose.msra.mxu0 0.0
    %198 = vmatprep.subr.mxu0 0.0
    %199 = vmatpush1.xpose.msra.mxu0 0.0
    %200 = vmatprep.subr.mxu0 0.0
    %201 = vmatpush1.xpose.msra.mxu0 0.0
    %202 = vmatprep.subr.mxu0 0.0
    %203 = vmatpush1.xpose.msra.mxu0 0.0
    %204 = vmatprep.subr.mxu0 0.0
    %205 = vmatpush1.xpose.msra.mxu0 0.0
    %206 = vmatprep.subr.mxu0 0.0
    %207 = vmatpush1.xpose.msra.mxu0 0.0
    %208 = vmatprep.subr.mxu0 0.0
    %209 = vmatpush1.xpose.msra.mxu0 0.0
    %210 = vmatprep.subr.mxu0 0.0
    %211 = vmatpush1.xpose.msra.mxu0 0.0
    %212 = vmatprep.mubr.f32.mxu0 0.0
    %213 = vmatmul.mubr.f32.gmra.mrb[0].mxu0 %v144
    %v214 = vpop.f32.mrb[0].mxu0
    %v215 = vadd.f32 0.0, %v214
    %v216 = vpop.f32.mrb[0].mxu0
    %217 = vdwg.mxu0
    %v218 = vmul.f32 %v215, %v138
    %v219 = vadd.f32 %v218, %v139
    %220 = vst.msk [vmem:[#allocation8] sm:$0xff] %vm143, %v219
    %221 = vrot.lane.b32.xlu0 %v137, 120
    %v222 = vpop.permute.xlu0 %221
    %223 = vrot.lane.b32.xlu0 %v137, 104
    %v224 = vpop.permute.xlu0 %223
    %v225 = vsel %vm143, %v222, 0
    %v227 = vsel %vm143, %v224, 0
    %229 = vmatprep.subr.mxu0 0.0
    %230 = vmatpush1.xpose.msra.mxu0 %v227
    %231 = vmatprep.subr.mxu0 0.0
    %232 = vmatpush1.xpose.msra.mxu0 0.0
    %233 = vmatprep.subr.mxu0 0.0
    %234 = vmatpush1.xpose.msra.mxu0 0.0
    %235 = vmatprep.subr.mxu0 0.0
    %236 = vmatpush1.xpose.msra.mxu0 0.0
    %237 = vmatprep.subr.mxu0 0.0
    %238 = vmatpush1.xpose.msra.mxu0 0.0
    %239 = vmatprep.subr.mxu0 0.0
    %240 = vmatpush1.xpose.msra.mxu0 0.0
    %241 = vmatprep.subr.mxu0 0.0
    %242 = vmatpush1.xpose.msra.mxu0 0.0
    %243 = vmatprep.subr.mxu0 0.0
    %244 = vmatpush1.xpose.msra.mxu0 0.0
    %245 = vmatprep.subr.mxu0 0.0
    %246 = vmatpush1.xpose.msra.mxu0 0.0
    %247 = vmatprep.subr.mxu0 0.0
    %248 = vmatpush1.xpose.msra.mxu0 0.0
    %249 = vmatprep.subr.mxu0 0.0
    %250 = vmatpush1.xpose.msra.mxu0 0.0
    %251 = vmatprep.subr.mxu0 0.0
    %252 = vmatpush1.xpose.msra.mxu0 0.0
    %253 = vmatprep.subr.mxu0 0.0
    %254 = vmatpush1.xpose.msra.mxu0 0.0
    %255 = vmatprep.subr.mxu0 0.0
    %256 = vmatpush1.xpose.msra.mxu0 0.0
    %257 = vmatprep.subr.mxu0 0.0
    %258 = vmatpush1.xpose.msra.mxu0 0.0
    %259 = vmatprep.subr.mxu0 0.0
    %260 = vmatpush1.xpose.msra.mxu0 0.0
    %261 = vmatprep.subr.mxu0 0.0
    %262 = vmatpush1.xpose.msra.mxu0 0.0
    %263 = vmatprep.subr.mxu0 0.0
    %264 = vmatpush1.xpose.msra.mxu0 0.0
    %265 = vmatprep.subr.mxu0 0.0
    %266 = vmatpush1.xpose.msra.mxu0 0.0
    %267 = vmatprep.subr.mxu0 0.0
    %268 = vmatpush1.xpose.msra.mxu0 0.0
    %269 = vmatprep.subr.mxu0 0.0
    %270 = vmatpush1.xpose.msra.mxu0 0.0
    %271 = vmatprep.subr.mxu0 0.0
    %272 = vmatpush1.xpose.msra.mxu0 0.0
    %273 = vmatprep.subr.mxu0 0.0
    %274 = vmatpush1.xpose.msra.mxu0 0.0
    %275 = vmatprep.subr.mxu0 0.0
    %276 = vmatpush1.xpose.msra.mxu0 0.0
    %277 = vmatprep.subr.mxu0 0.0
    %278 = vmatpush1.xpose.msra.mxu0 0.0
    %279 = vmatprep.subr.mxu0 0.0
    %280 = vmatpush1.xpose.msra.mxu0 0.0
    %281 = vmatprep.subr.mxu0 0.0
    %282 = vmatpush1.xpose.msra.mxu0 0.0
    %283 = vmatprep.subr.mxu0 0.0
    %284 = vmatpush1.xpose.msra.mxu0 0.0
    %285 = vmatprep.subr.mxu0 0.0
    %286 = vmatpush1.xpose.msra.mxu0 0.0
    %287 = vmatprep.subr.mxu0 0.0
    %288 = vmatpush1.xpose.msra.mxu0 0.0
    %289 = vmatprep.subr.mxu0 0.0
    %290 = vmatpush1.xpose.msra.mxu0 0.0
    %291 = vmatprep.subr.mxu0 0.0
    %292 = vmatpush1.xpose.msra.mxu0 0.0
    %293 = vmatprep.mubr.f32.mxu0 0.0
    %294 = vmatmul.mubr.f32.gmra.mrb[0].mxu0 %v225
    %v295 = vpop.f32.mrb[0].mxu0
    %v296 = vadd.f32 0.0, %v295
    %v297 = vpop.f32.mrb[0].mxu0
    %298 = vdwg.mxu0
    %v299 = vmul.f32 %v296, %v138
    %v300 = vadd.f32 %v299, %v139
    %s301 = scalar_lea.vmem [#allocation8], 8
    %302 = vst.msk [vmem:[%s301] sm:$0xff] %vm143, %v300
    %s303 = scalar_lea.vmem [#allocation2], 4
    %v304 = vld [vmem:[%s303] sm:$0xf]
    %v306 = vsel %vm88, %v304, 0
    %308 = vmatprep.subr.bf16.mxu0 0
    %309 = vmatpush1.bf16.msra.mxu0 %v84
    %310 = vmatprep.subr.bf16.mxu0 0
    %311 = vmatpush1.bf16.msra.mxu0 %v85
    %312 = vmatprep.subr.bf16.mxu0 0
    %313 = vmatpush1.bf16.msra.mxu0 0
    %314 = vmatprep.subr.bf16.mxu0 0
    %315 = vmatpush1.bf16.msra.mxu0 0
    %316 = vmatprep.subr.bf16.mxu0 0
    %317 = vmatpush1.bf16.msra.mxu0 0
    %318 = vmatprep.subr.bf16.mxu0 0
    %319 = vmatpush1.bf16.msra.mxu0 0
    %320 = vmatprep.subr.bf16.mxu0 0
    %321 = vmatpush1.bf16.msra.mxu0 0
    %322 = vmatprep.subr.bf16.mxu0 0
    %323 = vmatpush1.bf16.msra.mxu0 0
    %324 = vmatprep.subr.bf16.mxu0 0
    %325 = vmatpush1.bf16.msra.mxu0 0
    %326 = vmatprep.subr.bf16.mxu0 0
    %327 = vmatpush1.bf16.msra.mxu0 0
    %328 = vmatprep.subr.bf16.mxu0 0
    %329 = vmatpush1.bf16.msra.mxu0 0
    %330 = vmatprep.subr.bf16.mxu0 0
    %331 = vmatpush1.bf16.msra.mxu0 0
    %332 = vmatprep.subr.bf16.mxu0 0
    %333 = vmatpush1.bf16.msra.mxu0 0
    %334 = vmatprep.subr.bf16.mxu0 0
    %335 = vmatpush1.bf16.msra.mxu0 0
    %336 = vmatprep.subr.bf16.mxu0 0
    %337 = vmatpush1.bf16.msra.mxu0 0
    %338 = vmatprep.subr.bf16.mxu0 0
    %339 = vmatpush1.bf16.msra.mxu0 0
    %340 = vmatprep.mubr.bf16.mxu0 0
    %341 = vmatmul.mubr.bf16.gmra.mrb[0].mxu0 %v306
    %v342 = vpop.f32.mrb[0].mxu0
    %v343 = vadd.f32 %v74, %v342
    %v344 = vpop.f32.mrb[0].mxu0
    %v345 = vpop.f32.mrb[0].mxu0
    %v346 = vpop.f32.mrb[0].mxu0
    %347 = vdwg.mxu0
    %v348 = vmul.f32 %v343, %v68
    %350 = vrot.lane.b32.xlu0 %v348, 96
    %v351 = vpop.permute.xlu0 %350
    %v353 = vadd.f32 %v348, %v351
    %s354 = scalar_lea.vmem [#allocation7], 16
    %v355 = vld [vmem:[%s354] sm:$0xff]
    %v356 = vld [vmem:[%s354 + $0x8] sm:$0xff]
    %358 = vrot.lane.b32.xlu0 %v353, 112
    %v359 = vpop.permute.xlu0 %358
    %v360 = vsel %vm143, %v353, 0
    %v362 = vsel %vm143, %v359, 0
    %364 = vmatprep.subr.mxu0 0.0
    %365 = vmatpush1.xpose.msra.mxu0 %v362
    %366 = vmatprep.subr.mxu0 0.0
    %367 = vmatpush1.xpose.msra.mxu0 0.0
    %368 = vmatprep.subr.mxu0 0.0
    %369 = vmatpush1.xpose.msra.mxu0 0.0
    %370 = vmatprep.subr.mxu0 0.0
    %371 = vmatpush1.xpose.msra.mxu0 0.0
    %372 = vmatprep.subr.mxu0 0.0
    %373 = vmatpush1.xpose.msra.mxu0 0.0
    %374 = vmatprep.subr.mxu0 0.0
    %375 = vmatpush1.xpose.msra.mxu0 0.0
    %376 = vmatprep.subr.mxu0 0.0
    %377 = vmatpush1.xpose.msra.mxu0 0.0
    %378 = vmatprep.subr.mxu0 0.0
    %379 = vmatpush1.xpose.msra.mxu0 0.0
    %380 = vmatprep.subr.mxu0 0.0
    %381 = vmatpush1.xpose.msra.mxu0 0.0
    %382 = vmatprep.subr.mxu0 0.0
    %383 = vmatpush1.xpose.msra.mxu0 0.0
    %384 = vmatprep.subr.mxu0 0.0
    %385 = vmatpush1.xpose.msra.mxu0 0.0
    %386 = vmatprep.subr.mxu0 0.0
    %387 = vmatpush1.xpose.msra.mxu0 0.0
    %388 = vmatprep.subr.mxu0 0.0
    %389 = vmatpush1.xpose.msra.mxu0 0.0
    %390 = vmatprep.subr.mxu0 0.0
    %391 = vmatpush1.xpose.msra.mxu0 0.0
    %392 = vmatprep.subr.mxu0 0.0
    %393 = vmatpush1.xpose.msra.mxu0 0.0
    %394 = vmatprep.subr.mxu0 0.0
    %395 = vmatpush1.xpose.msra.mxu0 0.0
    %396 = vmatprep.subr.mxu0 0.0
    %397 = vmatpush1.xpose.msra.mxu0 0.0
    %398 = vmatprep.subr.mxu0 0.0
    %399 = vmatpush1.xpose.msra.mxu0 0.0
    %400 = vmatprep.subr.mxu0 0.0
    %401 = vmatpush1.xpose.msra.mxu0 0.0
    %402 = vmatprep.subr.mxu0 0.0
    %403 = vmatpush1.xpose.msra.mxu0 0.0
    %404 = vmatprep.subr.mxu0 0.0
    %405 = vmatpush1.xpose.msra.mxu0 0.0
    %406 = vmatprep.subr.mxu0 0.0
    %407 = vmatpush1.xpose.msra.mxu0 0.0
    %408 = vmatprep.subr.mxu0 0.0
    %409 = vmatpush1.xpose.msra.mxu0 0.0
    %410 = vmatprep.subr.mxu0 0.0
    %411 = vmatpush1.xpose.msra.mxu0 0.0
    %412 = vmatprep.subr.mxu0 0.0
    %413 = vmatpush1.xpose.msra.mxu0 0.0
    %414 = vmatprep.subr.mxu0 0.0
    %415 = vmatpush1.xpose.msra.mxu0 0.0
    %416 = vmatprep.subr.mxu0 0.0
    %417 = vmatpush1.xpose.msra.mxu0 0.0
    %418 = vmatprep.subr.mxu0 0.0
    %419 = vmatpush1.xpose.msra.mxu0 0.0
    %420 = vmatprep.subr.mxu0 0.0
    %421 = vmatpush1.xpose.msra.mxu0 0.0
    %422 = vmatprep.subr.mxu0 0.0
    %423 = vmatpush1.xpose.msra.mxu0 0.0
    %424 = vmatprep.subr.mxu0 0.0
    %425 = vmatpush1.xpose.msra.mxu0 0.0
    %426 = vmatprep.subr.mxu0 0.0
    %427 = vmatpush1.xpose.msra.mxu0 0.0
    %428 = vmatprep.mubr.f32.mxu0 0.0
    %429 = vmatmul.mubr.f32.gmra.mrb[0].mxu0 %v360
    %v430 = vpop.f32.mrb[0].mxu0
    %v431 = vadd.f32 0.0, %v430
    %v432 = vpop.f32.mrb[0].mxu0
    %433 = vdwg.mxu0
    %v434 = vmul.f32 %v431, %v355
    %v435 = vadd.f32 %v434, %v356
    %s436 = scalar_lea.vmem [#allocation8], 16
    %437 = vst.msk [vmem:[%s436] sm:$0xff] %vm143, %v435
    %438 = vrot.lane.b32.xlu0 %v353, 120
    %v439 = vpop.permute.xlu0 %438
    %440 = vrot.lane.b32.xlu0 %v353, 104
    %v441 = vpop.permute.xlu0 %440
    %v442 = vsel %vm143, %v439, 0
    %v444 = vsel %vm143, %v441, 0
    %446 = vmatprep.subr.mxu0 0.0
    %447 = vmatpush1.xpose.msra.mxu0 %v444
    %448 = vmatprep.subr.mxu0 0.0
    %449 = vmatpush1.xpose.msra.mxu0 0.0
    %450 = vmatprep.subr.mxu0 0.0
    %451 = vmatpush1.xpose.msra.mxu0 0.0
    %452 = vmatprep.subr.mxu0 0.0
    %453 = vmatpush1.xpose.msra.mxu0 0.0
    %454 = vmatprep.subr.mxu0 0.0
    %455 = vmatpush1.xpose.msra.mxu0 0.0
    %456 = vmatprep.subr.mxu0 0.0
    %457 = vmatpush1.xpose.msra.mxu0 0.0
    %458 = vmatprep.subr.mxu0 0.0
    %459 = vmatpush1.xpose.msra.mxu0 0.0
    %460 = vmatprep.subr.mxu0 0.0
    %461 = vmatpush1.xpose.msra.mxu0 0.0
    %462 = vmatprep.subr.mxu0 0.0
    %463 = vmatpush1.xpose.msra.mxu0 0.0
    %464 = vmatprep.subr.mxu0 0.0
    %465 = vmatpush1.xpose.msra.mxu0 0.0
    %466 = vmatprep.subr.mxu0 0.0
    %467 = vmatpush1.xpose.msra.mxu0 0.0
    %468 = vmatprep.subr.mxu0 0.0
    %469 = vmatpush1.xpose.msra.mxu0 0.0
    %470 = vmatprep.subr.mxu0 0.0
    %471 = vmatpush1.xpose.msra.mxu0 0.0
    %472 = vmatprep.subr.mxu0 0.0
    %473 = vmatpush1.xpose.msra.mxu0 0.0
    %474 = vmatprep.subr.mxu0 0.0
    %475 = vmatpush1.xpose.msra.mxu0 0.0
    %476 = vmatprep.subr.mxu0 0.0
    %477 = vmatpush1.xpose.msra.mxu0 0.0
    %478 = vmatprep.subr.mxu0 0.0
    %479 = vmatpush1.xpose.msra.mxu0 0.0
    %480 = vmatprep.subr.mxu0 0.0
    %481 = vmatpush1.xpose.msra.mxu0 0.0
    %482 = vmatprep.subr.mxu0 0.0
    %483 = vmatpush1.xpose.msra.mxu0 0.0
    %484 = vmatprep.subr.mxu0 0.0
    %485 = vmatpush1.xpose.msra.mxu0 0.0
    %486 = vmatprep.subr.mxu0 0.0
    %487 = vmatpush1.xpose.msra.mxu0 0.0
    %488 = vmatprep.subr.mxu0 0.0
    %489 = vmatpush1.xpose.msra.mxu0 0.0
    %490 = vmatprep.subr.mxu0 0.0
    %491 = vmatpush1.xpose.msra.mxu0 0.0
    %492 = vmatprep.subr.mxu0 0.0
    %493 = vmatpush1.xpose.msra.mxu0 0.0
    %494 = vmatprep.subr.mxu0 0.0
    %495 = vmatpush1.xpose.msra.mxu0 0.0
    %496 = vmatprep.subr.mxu0 0.0
    %497 = vmatpush1.xpose.msra.mxu0 0.0
    %498 = vmatprep.subr.mxu0 0.0
    %499 = vmatpush1.xpose.msra.mxu0 0.0
    %500 = vmatprep.subr.mxu0 0.0
    %501 = vmatpush1.xpose.msra.mxu0 0.0
    %502 = vmatprep.subr.mxu0 0.0
    %503 = vmatpush1.xpose.msra.mxu0 0.0
    %504 = vmatprep.subr.mxu0 0.0
    %505 = vmatpush1.xpose.msra.mxu0 0.0
    %506 = vmatprep.subr.mxu0 0.0
    %507 = vmatpush1.xpose.msra.mxu0 0.0
    %508 = vmatprep.subr.mxu0 0.0
    %509 = vmatpush1.xpose.msra.mxu0 0.0
    %510 = vmatprep.mubr.f32.mxu0 0.0
    %511 = vmatmul.mubr.f32.gmra.mrb[0].mxu0 %v442
    %v512 = vpop.f32.mrb[0].mxu0
    %v513 = vadd.f32 0.0, %v512
    %v514 = vpop.f32.mrb[0].mxu0
    %515 = vdwg.mxu0
    %v516 = vmul.f32 %v513, %v355
    %v517 = vadd.f32 %v516, %v356
    %s518 = scalar_lea.vmem [#allocation8], 24
    %519 = vst.msk [vmem:[%s518] sm:$0xff] %vm143, %v517
    // Predicated region
    $region34: #{tpu_custom_call.1} parent=1 // pred_check
      _
    $region35: #{tpu_custom_call.1} parent=1 // pred_check_branch
      %521 = sbr.rel (0) target = $region37
    $region36: #{tpu_custom_call.1} parent=1 // pred_region
      %s523 = ssub.s32 512, 512
      %524 = vsyncadd [#allocation4], %s523
      %s525 = sshll.u32 [#allocation8], 4
      %s526 = int_to_ptr.vmem [resolvable:$true] %s525
      %531 = dma.vmem_to_hbm [thread:$0]  %s526, 512, %s5, [#allocation4], 128, 128, 8
    $region37: #{tpu_custom_call.1} parent=1 // pred_fallthru
      _
    // Predicated region
    $region38: #{tpu_custom_call.1} parent=1 // pred_check
      _
    $region39: #{tpu_custom_call.1} parent=1 // pred_check_branch
      %533 = sbr.rel (0) target = $region41
    $region40: #{tpu_custom_call.1} parent=1 // pred_region
      %534 = dma.done [#allocation4], 512
    $region41: #{tpu_custom_call.1} parent=1 // pred_fallthru
      _
    %535 = vsyncpa [#allocation3], 1
    %536 = vsyncpa [#allocation6], 1
    %537 = vsyncpa [#allocation4], 1

</llo_original>
